<compile_context>
chip_gen: v7x
topology: tpu7x:2x2x1
jax: 0.10.0
libtpu: 0.0.40
codegen_flags: <defaults>
</compile_context>

<pallas_src>
import jax
import jax.numpy as jnp
from jax import lax
from jax.experimental import pallas as pl
from jax.experimental.pallas import tpu as pltpu

IN_FEATURES = 128
OUT_FEATURES = 8
TILE_B = 8192  # max rows per grid step; multiple of 128; ~4 MiB of x in f32


def _round_up(n, m):
    return ((n + m - 1) // m) * m


def _choose_tile(B, max_tb=TILE_B):
    """Rows per grid step.

    Always a multiple of 128 so the lane-dense (8, tb) output block is
    layout-legal; the ragged last tile (B not a multiple of tb) is masked by
    Pallas.  When everything would fit in a single tile we still split into an
    even number of tiles so v7x's two TensorCores both get work ("parallel"
    grid axis); harmless on single-TC v5e/v6e.
    """
    if B <= 128:
        return 128
    n_tiles = pl.cdiv(B, max_tb)
    if n_tiles == 1:
        n_tiles = 2
    elif n_tiles % 2:
        n_tiles += 1
    return min(max_tb, _round_up(pl.cdiv(B, n_tiles), 128))


def linear_relu_kernel(x_ref, w_ref, b_ref, o_ref):
    # x_ref: (tb, 128)   w_ref: (8, 128) [PyTorch layout]   b_ref: (8, 1)
    # o_ref: (8, tb)  -- batch on the lane axis (lane-dense stores).
    # W @ x^T expressed directly: contract w dim 1 with x dim 1 on the MXU.
    y = lax.dot_general(
        w_ref[...],
        x_ref[...],
        dimension_numbers=(((1,), (1,)), ((), ())),
        preferred_element_type=jnp.float32,
    )                                        # (8, tb)
    y = y + b_ref[...]                       # bias broadcast over lanes (VPU)
    o_ref[...] = jnp.maximum(y, 0.0).astype(o_ref.dtype)


def my_model_forward(x, weight, bias, max_tile_b=TILE_B):
    """x: (B, 128) f32; weight: (8, 128) f32 (PyTorch layout); bias: (8,) f32.

    Returns relu(x @ weight.T + bias) with shape (B, 8).
    """
    B = x.shape[0]
    tb = _choose_tile(B, max_tile_b)
    grid = (pl.cdiv(B, tb),)

    b2 = bias.reshape(OUT_FEATURES, 1)       # keep operands 2-D for TPU layout

    out_t = pl.pallas_call(
        linear_relu_kernel,
        out_shape=jax.ShapeDtypeStruct((OUT_FEATURES, B), x.dtype),
        grid_spec=pltpu.PrefetchScalarGridSpec(
            num_scalar_prefetch=0,
            grid=grid,
            in_specs=[
                # x: one (tb, 128) row tile per grid step -> double-buffered DMA.
                pl.BlockSpec((tb, IN_FEATURES), lambda i: (i, 0)),
                # weight/bias: constant block index -> DMA'd once, stay resident.
                pl.BlockSpec((OUT_FEATURES, IN_FEATURES), lambda i: (0, 0)),
                pl.BlockSpec((OUT_FEATURES, 1), lambda i: (0, 0)),
            ],
            # Lane-dense output: batch on lanes, unmasked full-lane stores.
            out_specs=pl.BlockSpec((OUT_FEATURES, tb), lambda i: (0, i)),
        ),
        compiler_params=pltpu.CompilerParams(
            # Row tiles are independent -> let v7x shard them across its 2 TCs.
            dimension_semantics=("parallel",),
        ),
        cost_estimate=pl.CostEstimate(
            flops=2 * B * IN_FEATURES * OUT_FEATURES,
            transcendentals=0,
            bytes_accessed=4 * (B * IN_FEATURES + B * OUT_FEATURES
                                + OUT_FEATURES * IN_FEATURES + OUT_FEATURES),
        ),
    )(x, weight, b2)

    # Tiny (8, B) -> (B, 8) transpose back to the nn.Linear output layout.
    return out_t.T


if __name__ == "__main__":
    key = jax.random.PRNGKey(0)
    kx, kw, kb = jax.random.split(key, 3)

    # Deterministic parameter init (matching nn.Linear(128, 8) shapes).
    bound = 1.0 / (IN_FEATURES ** 0.5)
    weight = jax.random.uniform(kw, (OUT_FEATURES, IN_FEATURES),
                                minval=-bound, maxval=bound, dtype=jnp.float32)
    bias = jax.random.uniform(kb, (OUT_FEATURES,),
                              minval=-bound, maxval=bound, dtype=jnp.float32)

    # Small input batch consistent with the forward: (B, 128).
    B = 8
    x = jax.random.normal(kx, (B, IN_FEATURES), dtype=jnp.float32)

    out = jax.block_until_ready(my_model_forward(x, weight, bias))

    # Reference check in plain JAX.
    ref = jnp.maximum(x @ weight.T + bias, 0.0)
    assert out.shape == (B, OUT_FEATURES)
    assert jnp.allclose(out, ref, atol=1e-5, rtol=1e-5)

    # Exercise the multi-tile + ragged-last-tile path (B not a multiple of the
    # tile size, grid of 2 balanced tiles).
    B2 = 2500
    x2 = jax.random.normal(kx, (B2, IN_FEATURES), dtype=jnp.float32)
    out2 = jax.block_until_ready(my_model_forward(x2, weight, bias))
    ref2 = jnp.maximum(x2 @ weight.T + bias, 0.0)
    assert out2.shape == (B2, OUT_FEATURES)
    assert jnp.allclose(out2, ref2, atol=1e-5, rtol=1e-5)

    print("KERNEL_OK")
</pallas_src>

<mosaic_0001>
module attributes {stable_mosaic.version = 11 : i64} {
  func.func @linear_relu_kernel(%arg0: i32, %arg1: memref<128x128xf32, #tpu.memory_space<vmem>>, %arg2: memref<8x128xf32, #tpu.memory_space<vmem>>, %arg3: memref<8x1xf32, #tpu.memory_space<vmem>>, %arg4: memref<8x128xf32, #tpu.memory_space<vmem>>) attributes {dimension_semantics = [#tpu.dimension_semantics<parallel>], iteration_bounds = array<i64: 1>, scalar_prefetch = 0 : i64, scratch_operands = 0 : i64, tpu.core_type = #tpu.core_type<tc>, window_params = [{transform_indices = @transform_0, window_bounds = array<i64: 128, 128>}, {pipeline_mode = #tpu.pipeline_mode<synchronous>, transform_indices = @transform_1, window_bounds = array<i64: 8, 128>}, {pipeline_mode = #tpu.pipeline_mode<synchronous>, transform_indices = @transform_2, window_bounds = array<i64: 8, 1>}, {transform_indices = @transform_3, window_bounds = array<i64: 8, 128>}]} {
    %c0 = arith.constant 0 : index
    %c0_0 = arith.constant 0 : index
    %0 = vector.load %arg2[%c0, %c0_0] : memref<8x128xf32, #tpu.memory_space<vmem>>, vector<8x128xf32>
    %c0_1 = arith.constant 0 : index
    %c0_2 = arith.constant 0 : index
    %1 = vector.load %arg1[%c0_1, %c0_2] : memref<128x128xf32, #tpu.memory_space<vmem>>, vector<128x128xf32>
    %cst = arith.constant dense<0.000000e+00> : vector<8x128xf32>
    %2 = tpu.matmul %0, %1, %cst {dimension_numbers = #tpu.dot_dimension_numbers<[1], [1], [0], [0], [0, 0, 1, 0], [], []>} : vector<8x128xf32>, vector<128x128xf32>, vector<8x128xf32> -> vector<8x128xf32>
    %c0_3 = arith.constant 0 : index
    %c0_4 = arith.constant 0 : index
    %3 = vector.load %arg3[%c0_3, %c0_4] : memref<8x1xf32, #tpu.memory_space<vmem>>, vector<8x1xf32>
    %4 = vector.broadcast %3 : vector<8x1xf32> to vector<8x128xf32>
    %5 = arith.addf %2, %4 : vector<8x128xf32>
    %cst_5 = arith.constant 0.000000e+00 : f32
    %6 = vector.broadcast %cst_5 : f32 to vector<8x128xf32>
    %7 = arith.maximumf %5, %6 : vector<8x128xf32>
    %c0_6 = arith.constant 0 : index
    %c0_7 = arith.constant 0 : index
    %8 = vector.load %arg4[%c0_6, %c0_7] : memref<8x128xf32, #tpu.memory_space<vmem>>, vector<8x128xf32>
    tpu.vector_store %arg4[%c0_6, %c0_7], %7 {strides = array<i32>} : memref<8x128xf32, #tpu.memory_space<vmem>>, vector<8x128xf32>,
    return
  }
  func.func @transform_0(%arg0: i32) -> (i32, i32) {
    %c0_i32 = arith.constant 0 : i32
    %c0_i32_0 = arith.constant 0 : i32
    return %arg0, %c0_i32 : i32, i32
  }
  func.func @transform_1(%arg0: i32) -> (i32, i32) {
    %c0_i32 = arith.constant 0 : i32
    %c0_i32_0 = arith.constant 0 : i32
    %c0_i32_1 = arith.constant 0 : i32
    return %c0_i32, %c0_i32_0 : i32, i32
  }
  func.func @transform_2(%arg0: i32) -> (i32, i32) {
    %c0_i32 = arith.constant 0 : i32
    %c0_i32_0 = arith.constant 0 : i32
    %c0_i32_1 = arith.constant 0 : i32
    return %c0_i32, %c0_i32_0 : i32, i32
  }
  func.func @transform_3(%arg0: i32) -> (i32, i32) {
    %c0_i32 = arith.constant 0 : i32
    %c0_i32_0 = arith.constant 0 : i32
    return %c0_i32, %arg0 : i32, i32
  }
}

</mosaic_0001>

<llo_original>
// kernel: tpu_custom_call.1
$region0: #{tpu_custom_call.1}
  #allocation0 [shape = 'u32[]', space=smem, size = 0x4, offset = 0x4, fixed_abs, tag = 'smem constant byte address 0x4 - core index']
  #allocation1 [shape = 'u32[144,128]{1,0:T(1,128)}', space=vmem, size = 0x12000, scoped, tag = 'internal scratch']
  %s0 = inlined_call_operand.vmem [shape: f32[8,128], index: 0, kind: input, shape index: {}]
  %s1 = inlined_call_operand.hbm [shape: f32[8,128], index: 1, kind: input, shape index: {}]
  %s2 = inlined_call_operand.vmem [shape: f32[8,1], index: 2, kind: input, shape index: {}]
  %s3 = inlined_call_operand.hbm [shape: f32[8,8], index: 3, kind: output, shape index: {}]
  %s4 = sld [smem:[#allocation0]]
  $region26: #{tpu_custom_call.1} parent=0
    _
  %s6 = ssub.s32 1, %s4
  %s7 = scalar_select 0, %s6, %s4
  $region1: #{tpu_custom_call.1} parent=0
    #allocation2 [shape = 'u8[4096]{0}', space=vmem, size = 0x1000, scoped, tag = 'input window, operand 1, single buffered']
    #allocation3 [shape = 's32[1]{0}', space=sflag, size = 0x4, scoped, tag = 'scoped memory for tpu_custom_call.1']
    #allocation4 [shape = 's32[1]{0}', space=sflag, size = 0x4, scoped, tag = 'scoped memory for tpu_custom_call.1']
    #allocation5 [shape = 'u8[4096]{0}', space=vmem, size = 0x1000, scoped, tag = 'output window, operand 0, single buffered']
    %8 = vsyncpa [#allocation3], 0
    %9 = vsyncpa [#allocation4], 0
    // Predicated region
    $region2: #{tpu_custom_call.1} parent=1 // pred_check
      _
    $region3: #{tpu_custom_call.1} parent=1 // pred_check_branch
      %11 = sbr.rel (0) target = $region5
    $region4: #{tpu_custom_call.1} parent=1 // pred_region
      _
    $region5: #{tpu_custom_call.1} parent=1 // pred_fallthru
      _
    // Predicated region
    $region6: #{tpu_custom_call.1} parent=1 // pred_check
      _
    $region7: #{tpu_custom_call.1} parent=1 // pred_check_branch
      %13 = sbr.rel (0) target = $region9
    $region8: #{tpu_custom_call.1} parent=1 // pred_region
      %s15 = ssub.s32 128, 128
      %16 = vsyncadd [#allocation3], %s15
      %s18 = sshll.u32 [#allocation2], 4
      %s19 = int_to_ptr.vmem [resolvable:$true] %s18
      %21 = dma.hbm_to_vmem [thread:$0]  %s1, 128, %s19, [#allocation3]
    $region9: #{tpu_custom_call.1} parent=1 // pred_fallthru
      _
    // Predicated region
    $region10: #{tpu_custom_call.1} parent=1 // pred_check
      _
    $region11: #{tpu_custom_call.1} parent=1 // pred_check_branch
      %23 = sbr.rel (0) target = $region13
    $region12: #{tpu_custom_call.1} parent=1 // pred_region
      _
    $region13: #{tpu_custom_call.1} parent=1 // pred_fallthru
      _
    // Predicated region
    $region14: #{tpu_custom_call.1} parent=1 // pred_check
      _
    $region15: #{tpu_custom_call.1} parent=1 // pred_check_branch
      %25 = sbr.rel (0) target = $region17
    $region16: #{tpu_custom_call.1} parent=1 // pred_region
      %26 = dma.done [#allocation3], 128
    $region17: #{tpu_custom_call.1} parent=1 // pred_fallthru
      _
    %v27 = vld [vmem:[#allocation2] sm:$0xff]
    %v28 = vld [vmem:[%s0] sm:$0xff]
    %v29 = vld [vmem:[%s0 + $0x8] sm:$0xff]
    %v30 = vld [vmem:[%s0 + $0x10] sm:$0xff]
    %v31 = vld [vmem:[%s0 + $0x18] sm:$0xff]
    %v32 = vld [vmem:[%s0 + $0x20] sm:$0xff]
    %v33 = vld [vmem:[%s0 + $0x28] sm:$0xff]
    %v34 = vld [vmem:[%s0 + $0x30] sm:$0xff]
    %v35 = vld [vmem:[%s0 + $0x38] sm:$0xff]
    %v36 = vld [vmem:[%s0 + $0x40] sm:$0xff]
    %v37 = vld [vmem:[%s0 + $0x48] sm:$0xff]
    %v38 = vld [vmem:[%s0 + $0x50] sm:$0xff]
    %v39 = vld [vmem:[%s0 + $0x58] sm:$0xff]
    %v40 = vld [vmem:[%s0 + $0x60] sm:$0xff]
    %v41 = vld [vmem:[%s0 + $0x68] sm:$0xff]
    %v42 = vld [vmem:[%s0 + $0x70] sm:$0xff]
    %v43 = vld [vmem:[%s0 + $0x78] sm:$0xff]
    %v44 = vld [vmem:[%s2] sm:$0xff]
    %46 = vset.pattern.permute.xlu0 0
    %47 = vperm.xlu0 %46, %v44
    %v48 = vpop.permute.xlu0 %47
    %50 = vmatprep.subr.mxu0 0.0
    %51 = vmatpush1.xpose.msra.mxu0 %v28
    %52 = vmatprep.subr.mxu0 0.0
    %53 = vmatpush1.xpose.msra.mxu0 %v29
    %54 = vmatprep.subr.mxu0 0.0
    %55 = vmatpush1.xpose.msra.mxu0 %v30
    %56 = vmatprep.subr.mxu0 0.0
    %57 = vmatpush1.xpose.msra.mxu0 %v31
    %58 = vmatprep.subr.mxu0 0.0
    %59 = vmatpush1.xpose.msra.mxu0 %v32
    %60 = vmatprep.subr.mxu0 0.0
    %61 = vmatpush1.xpose.msra.mxu0 %v33
    %62 = vmatprep.subr.mxu0 0.0
    %63 = vmatpush1.xpose.msra.mxu0 %v34
    %64 = vmatprep.subr.mxu0 0.0
    %65 = vmatpush1.xpose.msra.mxu0 %v35
    %66 = vmatprep.subr.mxu0 0.0
    %67 = vmatpush1.xpose.msra.mxu0 %v36
    %68 = vmatprep.subr.mxu0 0.0
    %69 = vmatpush1.xpose.msra.mxu0 %v37
    %70 = vmatprep.subr.mxu0 0.0
    %71 = vmatpush1.xpose.msra.mxu0 %v38
    %72 = vmatprep.subr.mxu0 0.0
    %73 = vmatpush1.xpose.msra.mxu0 %v39
    %74 = vmatprep.subr.mxu0 0.0
    %75 = vmatpush1.xpose.msra.mxu0 %v40
    %76 = vmatprep.subr.mxu0 0.0
    %77 = vmatpush1.xpose.msra.mxu0 %v41
    %78 = vmatprep.subr.mxu0 0.0
    %79 = vmatpush1.xpose.msra.mxu0 %v42
    %80 = vmatprep.subr.mxu0 0.0
    %81 = vmatpush1.xpose.msra.mxu0 %v43
    %82 = vmatprep.subr.mxu0 0.0
    %83 = vmatpush1.xpose.msra.mxu0 0.0
    %84 = vmatprep.subr.mxu0 0.0
    %85 = vmatpush1.xpose.msra.mxu0 0.0
    %86 = vmatprep.subr.mxu0 0.0
    %87 = vmatpush1.xpose.msra.mxu0 0.0
    %88 = vmatprep.subr.mxu0 0.0
    %89 = vmatpush1.xpose.msra.mxu0 0.0
    %90 = vmatprep.subr.mxu0 0.0
    %91 = vmatpush1.xpose.msra.mxu0 0.0
    %92 = vmatprep.subr.mxu0 0.0
    %93 = vmatpush1.xpose.msra.mxu0 0.0
    %94 = vmatprep.subr.mxu0 0.0
    %95 = vmatpush1.xpose.msra.mxu0 0.0
    %96 = vmatprep.subr.mxu0 0.0
    %97 = vmatpush1.xpose.msra.mxu0 0.0
    %98 = vmatprep.subr.mxu0 0.0
    %99 = vmatpush1.xpose.msra.mxu0 0.0
    %100 = vmatprep.subr.mxu0 0.0
    %101 = vmatpush1.xpose.msra.mxu0 0.0
    %102 = vmatprep.subr.mxu0 0.0
    %103 = vmatpush1.xpose.msra.mxu0 0.0
    %104 = vmatprep.subr.mxu0 0.0
    %105 = vmatpush1.xpose.msra.mxu0 0.0
    %106 = vmatprep.subr.mxu0 0.0
    %107 = vmatpush1.xpose.msra.mxu0 0.0
    %108 = vmatprep.subr.mxu0 0.0
    %109 = vmatpush1.xpose.msra.mxu0 0.0
    %110 = vmatprep.subr.mxu0 0.0
    %111 = vmatpush1.xpose.msra.mxu0 0.0
    %112 = vmatprep.subr.mxu0 0.0
    %113 = vmatpush1.xpose.msra.mxu0 0.0
    %114 = vmatprep.mubr.f32.mxu0 0.0
    %115 = vmatmul.mubr.f32.gmra.mrb[0].mxu0 %v27
    %v116 = vpop.f32.mrb[0].mxu0
    %v117 = vadd.f32 %v48, %v116
    %v118 = vpop.f32.mrb[0].mxu0
    %119 = vdwg.mxu0
    %v120 = vmax.f32 %v117, 0.0
    %121 = vst [vmem:[#allocation5] sm:$0xff] %v120
    // Predicated region
    $region18: #{tpu_custom_call.1} parent=1 // pred_check
      _
    $region19: #{tpu_custom_call.1} parent=1 // pred_check_branch
      %123 = sbr.rel (0) target = $region21
    $region20: #{tpu_custom_call.1} parent=1 // pred_region
      %s125 = ssub.s32 128, 128
      %126 = vsyncadd [#allocation4], %s125
      %s128 = sshll.u32 [#allocation5], 4
      %s129 = int_to_ptr.vmem [resolvable:$true] %s128
      %131 = dma.vmem_to_hbm [thread:$0]  %s129, 128, %s3, [#allocation4]
    $region21: #{tpu_custom_call.1} parent=1 // pred_fallthru
      _
    // Predicated region
    $region22: #{tpu_custom_call.1} parent=1 // pred_check
      _
    $region23: #{tpu_custom_call.1} parent=1 // pred_check_branch
      %133 = sbr.rel (0) target = $region25
    $region24: #{tpu_custom_call.1} parent=1 // pred_region
      %134 = dma.done [#allocation4], 128
    $region25: #{tpu_custom_call.1} parent=1 // pred_fallthru
      _
    %135 = vsyncpa [#allocation3], 1
    %136 = vsyncpa [#allocation4], 1

</llo_original>
